<compile_context>
chip_gen: v7x
topology: tpu7x:2x2x1
jax: 0.10.0
libtpu: 0.0.40
codegen_flags: <defaults>
</compile_context>

<pallas_src>
import jax
import jax.numpy as jnp
from jax.experimental import pallas as pl
from jax.experimental.pallas import tpu as pltpu

POOL = 3  # kernel_size == stride for MaxPool2d(kernel_size=3)


def _maxpool_kernel(x_ref, o_ref):
    """x_ref: (1, ih_blk, W, C) NHWC tile  ->  o_ref: (1, oh_t, OW, C)."""
    oh_t = o_ref.shape[1]
    ow = o_ref.shape[2]
    w = x_ref.shape[2]
    c = x_ref.shape[3]

    # ---- H pool (leading-dim ops only) -----------------------------------
    x = x_ref[0]                                   # (ih_blk, W, C)
    x = x[: oh_t * POOL]                           # drop unused tail rows (<= 2)
    # Split H into (oh_t, POOL): last two dims untouched -> free reshape.
    xm = jnp.max(x.reshape(oh_t, POOL, w, c), axis=1)   # (oh_t, W, C)

    # ---- W pool -----------------------------------------------------------
    # Non-overlapping, contiguous 3-wide windows on the sublane (W) axis.
    # Assemble all pooled columns into ONE tile value, then a single store
    # (no per-column masked stores).
    cols = [
        jnp.max(xm[:, j * POOL:(j + 1) * POOL, :], axis=1, keepdims=True)
        for j in range(ow)
    ]
    res = jnp.concatenate(cols, axis=1) if ow > 1 else cols[0]   # (oh_t, OW, C)
    o_ref[0] = res


def _vmem_budget_bytes():
    """(vmem_limit_bytes, per-input-block budget) sized per chip generation."""
    cap = None
    try:
        cap = pltpu.get_tpu_info().vmem_capacity_bytes
    except Exception:
        cap = None
    if not cap:
        cap = 64 * 1024 * 1024                      # conservative (v7x per-TC VMEM)
    vmem_limit = min(cap // 2, 96 * 1024 * 1024)    # 32 MiB v7x, 64 MiB v5e/v6e
    vmem_limit = max(vmem_limit, 16 * 1024 * 1024)
    # Footprint per step ~ 2*in (double buffer) + in (loaded copy) + in/3 (xm)
    # + 2*out  ->  keep the input block at <= limit/4.
    return vmem_limit, vmem_limit // 4


def maxpool2d_3x3_nhwc(x_nhwc, *, block_rows=None):
    """MaxPool2d(kernel_size=3, stride=3, ceil_mode=False) on NHWC input."""
    N, H, W, C = x_nhwc.shape
    OH = (H - POOL) // POOL + 1
    OW = (W - POOL) // POOL + 1
    assert OH >= 1 and OW >= 1, "input smaller than pooling window"

    vmem_limit, in_budget = _vmem_budget_bytes()
    itemsize = jnp.dtype(x_nhwc.dtype).itemsize

    if block_rows is None:
        in_row_bytes = POOL * W * C * itemsize       # input bytes per output row
        block_rows = max(1, min(OH, in_budget // max(in_row_bytes, 1)))
        # v7x megacore: make sure both TensorCores get work when possible.
        if N * pl.cdiv(OH, block_rows) < 2 and OH >= 2:
            block_rows = pl.cdiv(OH, 2)
    oh_tile = int(block_rows)
    n_oh_tiles = pl.cdiv(OH, oh_tile)

    if n_oh_tiles == 1:
        # Whole image per step; input block H dim equals the full array dim so
        # the (8,128) block constraint is trivially satisfied for any H.
        oh_tile = OH
        ih_blk = H
    else:
        # Input rows per step; tail-tile padding only ever feeds padded
        # (discarded) output rows because ih_blk == oh_tile * POOL.
        ih_blk = oh_tile * POOL

    return pl.pallas_call(
        _maxpool_kernel,
        out_shape=jax.ShapeDtypeStruct((N, OH, OW, C), x_nhwc.dtype),
        grid=(N, n_oh_tiles),
        in_specs=[
            # One batch element x oh_tile pooling-window rows x full (W, C).
            # Last two block dims equal the full array dims -> valid for any W/C.
            pl.BlockSpec((1, ih_blk, W, C), lambda n, t: (n, t, 0, 0)),
        ],
        out_specs=pl.BlockSpec((1, oh_tile, OW, C), lambda n, t: (n, t, 0, 0)),
        compiler_params=pltpu.CompilerParams(
            # Both grid axes independent -> shard across v7x's two cores.
            dimension_semantics=("parallel", "parallel"),
            vmem_limit_bytes=vmem_limit,
        ),
    )(x_nhwc)


@jax.jit
def maxpool2d_3x3(x_nchw):
    """PyTorch-layout entry point (NCHW in / NCHW out) == Ocean.forward."""
    x_nhwc = jnp.transpose(x_nchw, (0, 2, 3, 1))
    out_nhwc = maxpool2d_3x3_nhwc(x_nhwc)
    return jnp.transpose(out_nhwc, (0, 3, 1, 2))


if __name__ == "__main__":
    key = jax.random.PRNGKey(0)
    k1, k2 = jax.random.split(key)

    # Matches the NCHW convention of the PyTorch module.
    x = jax.random.normal(k1, (2, 4, 16, 16), dtype=jnp.float32)
    out = jax.block_until_ready(maxpool2d_3x3(x))

    ref = jax.lax.reduce_window(
        x, -jnp.inf, jax.lax.max,
        window_dimensions=(1, 1, POOL, POOL),
        window_strides=(1, 1, POOL, POOL),
        padding="VALID",
    )
    assert out.shape == (2, 4, 5, 5), out.shape
    assert jnp.array_equal(out, ref), "mismatch vs reference maxpool (NCHW path)"

    # NHWC entry point with explicit row tiling including a partial tail tile
    # (grid (1, 3); exercises the padding-alignment invariant).
    x2 = jax.random.normal(k2, (1, 16, 10, 4), dtype=jnp.float32)  # NHWC
    out2 = jax.block_until_ready(maxpool2d_3x3_nhwc(x2, block_rows=2))
    ref2 = jax.lax.reduce_window(
        x2, -jnp.inf, jax.lax.max,
        window_dimensions=(1, POOL, POOL, 1),
        window_strides=(1, POOL, POOL, 1),
        padding="VALID",
    )
    assert out2.shape == ref2.shape, (out2.shape, ref2.shape)
    assert jnp.array_equal(out2, ref2), "mismatch vs reference maxpool (NHWC path)"

    print("KERNEL_OK")
</pallas_src>

<mosaic_0001>
module attributes {stable_mosaic.version = 11 : i64} {
  func.func @_maxpool_kernel(%arg0: i32, %arg1: i32, %arg2: memref<1x16x16x4xf32, #tpu.memory_space<vmem>>, %arg3: memref<1x5x5x4xf32, #tpu.memory_space<vmem>>) attributes {dimension_semantics = [#tpu.dimension_semantics<parallel>, #tpu.dimension_semantics<parallel>], iteration_bounds = array<i64: 2, 1>, scalar_prefetch = 0 : i64, scratch_operands = 0 : i64, tpu.core_type = #tpu.core_type<tc>, window_params = [{transform_indices = @transform_0, window_bounds = array<i64: 1, 16, 16, 4>}, {transform_indices = @transform_1, window_bounds = array<i64: 1, 5, 5, 4>}]} {
    %c0 = arith.constant 0 : index
    %c0_0 = arith.constant 0 : index
    %c0_1 = arith.constant 0 : index
    %c0_2 = arith.constant 0 : index
    %0 = vector.load %arg2[%c0, %c0_0, %c0_1, %c0_2] : memref<1x16x16x4xf32, #tpu.memory_space<vmem>>, vector<1x16x16x4xf32>
    %1 = vector.shape_cast %0 : vector<1x16x16x4xf32> to vector<16x16x4xf32>
    %2 = vector.extract_strided_slice %1 {offsets = [0, 0, 0], sizes = [15, 16, 4], strides = [1, 1, 1]} : vector<16x16x4xf32> to vector<15x16x4xf32>
    %3 = vector.shape_cast %2 : vector<15x16x4xf32> to vector<5x3x16x4xf32>
    %cst = arith.constant dense<0xFF800000> : vector<5x16x4xf32>
    %4 = vector.multi_reduction <maximumf>, %3, %cst [1] : vector<5x3x16x4xf32> to vector<5x16x4xf32>
    %5 = vector.extract_strided_slice %4 {offsets = [0, 0, 0], sizes = [5, 3, 4], strides = [1, 1, 1]} : vector<5x16x4xf32> to vector<5x3x4xf32>
    %cst_3 = arith.constant dense<0xFF800000> : vector<5x4xf32>
    %6 = vector.multi_reduction <maximumf>, %5, %cst_3 [1] : vector<5x3x4xf32> to vector<5x4xf32>
    %7 = vector.shape_cast %6 : vector<5x4xf32> to vector<5x1x4xf32>
    %8 = vector.extract_strided_slice %4 {offsets = [0, 3, 0], sizes = [5, 3, 4], strides = [1, 1, 1]} : vector<5x16x4xf32> to vector<5x3x4xf32>
    %cst_4 = arith.constant dense<0xFF800000> : vector<5x4xf32>
    %9 = vector.multi_reduction <maximumf>, %8, %cst_4 [1] : vector<5x3x4xf32> to vector<5x4xf32>
    %10 = vector.shape_cast %9 : vector<5x4xf32> to vector<5x1x4xf32>
    %11 = vector.extract_strided_slice %4 {offsets = [0, 6, 0], sizes = [5, 3, 4], strides = [1, 1, 1]} : vector<5x16x4xf32> to vector<5x3x4xf32>
    %cst_5 = arith.constant dense<0xFF800000> : vector<5x4xf32>
    %12 = vector.multi_reduction <maximumf>, %11, %cst_5 [1] : vector<5x3x4xf32> to vector<5x4xf32>
    %13 = vector.shape_cast %12 : vector<5x4xf32> to vector<5x1x4xf32>
    %14 = vector.extract_strided_slice %4 {offsets = [0, 9, 0], sizes = [5, 3, 4], strides = [1, 1, 1]} : vector<5x16x4xf32> to vector<5x3x4xf32>
    %cst_6 = arith.constant dense<0xFF800000> : vector<5x4xf32>
    %15 = vector.multi_reduction <maximumf>, %14, %cst_6 [1] : vector<5x3x4xf32> to vector<5x4xf32>
    %16 = vector.shape_cast %15 : vector<5x4xf32> to vector<5x1x4xf32>
    %17 = vector.extract_strided_slice %4 {offsets = [0, 12, 0], sizes = [5, 3, 4], strides = [1, 1, 1]} : vector<5x16x4xf32> to vector<5x3x4xf32>
    %cst_7 = arith.constant dense<0xFF800000> : vector<5x4xf32>
    %18 = vector.multi_reduction <maximumf>, %17, %cst_7 [1] : vector<5x3x4xf32> to vector<5x4xf32>
    %19 = vector.shape_cast %18 : vector<5x4xf32> to vector<5x1x4xf32>
    %20 = tpu.concatenate %7, %10, %13, %16, %19 in 1 : vector<5x1x4xf32>, vector<5x1x4xf32>, vector<5x1x4xf32>, vector<5x1x4xf32>, vector<5x1x4xf32> -> vector<5x5x4xf32>
    %c0_8 = arith.constant 0 : index
    %c0_9 = arith.constant 0 : index
    %c0_10 = arith.constant 0 : index
    %c0_11 = arith.constant 0 : index
    %21 = vector.load %arg3[%c0_8, %c0_9, %c0_10, %c0_11] : memref<1x5x5x4xf32, #tpu.memory_space<vmem>>, vector<1x5x5x4xf32>
    %22 = vector.shape_cast %21 : vector<1x5x5x4xf32> to vector<5x5x4xf32>
    %23 = vector.shape_cast %20 : vector<5x5x4xf32> to vector<1x5x5x4xf32>
    tpu.vector_store %arg3[%c0_8, %c0_9, %c0_10, %c0_11], %23 {strides = array<i32>} : memref<1x5x5x4xf32, #tpu.memory_space<vmem>>, vector<1x5x5x4xf32>,
    return
  }
  func.func @transform_0(%arg0: i32, %arg1: i32) -> (i32, i32, i32, i32) {
    %c0_i32 = arith.constant 0 : i32
    %c0_i32_0 = arith.constant 0 : i32
    %c0_i32_1 = arith.constant 0 : i32
    return %arg0, %arg1, %c0_i32, %c0_i32_0 : i32, i32, i32, i32
  }
  func.func @transform_1(%arg0: i32, %arg1: i32) -> (i32, i32, i32, i32) {
    %c0_i32 = arith.constant 0 : i32
    %c0_i32_0 = arith.constant 0 : i32
    %c0_i32_1 = arith.constant 0 : i32
    return %arg0, %arg1, %c0_i32, %c0_i32_0 : i32, i32, i32, i32
  }
}

</mosaic_0001>

<llo_original>
// kernel: maxpool2d_3x3.1
$region0: #{maxpool2d_3x3.1}
  #allocation0 [shape = 'u32[]', space=smem, size = 0x4, offset = 0x4, fixed_abs, tag = 'smem constant byte address 0x4 - core index']
  #allocation1 [shape = 'u32[144,128]{1,0:T(1,128)}', space=vmem, size = 0x12000, scoped, tag = 'internal scratch']
  %s0 = inlined_call_operand.vmem [shape: f32[2,16,16,4], index: 0, kind: input, shape index: {}]
  %s1 = inlined_call_operand.vmem [shape: f32[2,5,5,4], index: 1, kind: output, shape index: {}]
  %s2 = sld [smem:[#allocation0]]
  $region37: #{maxpool2d_3x3.1} parent=0
    _
  %s4 = ssub.s32 1, %s2
  %s5 = scalar_select 0, %s4, %s2
  loop: start=0, step=1, limit=4
  $region2: #{maxpool2d_3x3.1} parent=0 // loop_pre_header
    _
  $region3: #{maxpool2d_3x3.1} parent=0 // loop_header
    %s7 = sphi 0, %s11
    %p8 = scmp.ge.s32.totalorder %s7, 4
    %s14 = sphi 0, %s26
    %s15 = sphi 0, %s22
    %s16 = sphi 0, %s14
    %s17 = sphi 0, %s15
    %s18 = sphi 0, %s16
    %s19 = sphi 0, %s17
    %s31 = sphi 0, %s33
    %s34 = sphi 0, %s31
    %s35 = sphi 0, %s34
    %s51 = sphi 0, %s35
    %s59 = sphi 0, %s61
    %s62 = sphi 0, %s59
    %s63 = sphi 0, %s62
    %s79 = sphi 0, %s63
  $region4: #{maxpool2d_3x3.1} parent=0 // loop_header_branch
    %10 = sbr.rel (%p8) target = $region8
  $region5: #{maxpool2d_3x3.1} parent=0 // loop_body
    %s12 = ssub.s32 %s7, 1
    %s13 = ssub.s32 %s7, 2
    %s20 = sadd.s32 1, %s15
    %p21 = scmp.ge.s32.totalorder %s20, 1
    %s22 = scalar_select %p21, 0, %s20
    %s23 = sadd.s32 1, %s14
    %s24 = scalar_select %p21, %s23, %s14
    %p25 = scmp.ge.s32.totalorder %s24, 2
    %s26 = scalar_select %p25, 0, %s24
    %s27 = ssub.s32 %s14, %s26
    %s28 = ssub.s32 %s15, %s22
    %s29 = sor.u32 %s27, %s28
    %p30 = scmp.eq.s32.totalorder %s29, 0
    %s32 = sadd.s32 %s31, 1
    %s33 = scalar_select %p30, %s31, %s32
    %p36 = pneg %p30
    %p37 = scmp.eq.s32.totalorder %s7, 1
    %p38 = por %p36, %p37
    %p39 = scmp.ne.s32.totalorder %s31, %s34
    %p40 = scmp.eq.s32.totalorder %s7, 0
    %p41 = por %p39, %p40
    %p42 = scmp.ne.s32.totalorder %s31, %s34
    %p43 = scmp.eq.s32.totalorder %s12, 1
    %p44 = por %p42, %p43
    %p45 = scmp.ne.s32.totalorder %s34, %s35
    %p46 = scmp.eq.s32.totalorder %s12, 0
    %p47 = por %p45, %p46
    %p48 = scmp.ne.s32.totalorder %s34, %s35
    %p49 = scmp.eq.s32.totalorder %s13, 1
    %p50 = por %p48, %p49
    %p52 = scmp.ne.s32.totalorder %s35, %s51
    %p53 = scmp.eq.s32.totalorder %s13, 0
    %p54 = por %p52, %p53
    %s55 = ssub.s32 %s14, %s26
    %s56 = ssub.s32 %s15, %s22
    %s57 = sor.u32 %s55, %s56
    %p58 = scmp.eq.s32.totalorder %s57, 0
    %s60 = sadd.s32 %s59, 1
    %s61 = scalar_select %p58, %s59, %s60
    %p64 = pneg %p58
    %p65 = scmp.eq.s32.totalorder %s7, 1
    %p66 = por %p64, %p65
    %p67 = scmp.ne.s32.totalorder %s59, %s62
    %p68 = scmp.eq.s32.totalorder %s7, 0
    %p69 = por %p67, %p68
    %p70 = scmp.ne.s32.totalorder %s59, %s62
    %p71 = scmp.eq.s32.totalorder %s12, 1
    %p72 = por %p70, %p71
    %p73 = scmp.ne.s32.totalorder %s62, %s63
    %p74 = scmp.eq.s32.totalorder %s12, 0
    %p75 = por %p73, %p74
    %p76 = scmp.ne.s32.totalorder %s62, %s63
    %p77 = scmp.eq.s32.totalorder %s13, 1
    %p78 = por %p76, %p77
    %p80 = scmp.ne.s32.totalorder %s63, %s79
    %p81 = scmp.eq.s32.totalorder %s13, 0
    %p82 = por %p80, %p81
    %p83 = scmp.le.s32.totalorder 1, %s7
    %p84 = scmp.lt.s32.totalorder %s7, 3
    %p85 = pnand %p83, %p84
    %p86 = pneg %p85
    // Predicated region
    $region9: #{maxpool2d_3x3.1} parent=5 // pred_check
      _
    $region10: #{maxpool2d_3x3.1} parent=5 // pred_check_branch
      %88 = sbr.rel (%p85) target = $region12
    $region11: #{maxpool2d_3x3.1} parent=5 // pred_region
      %s89 = ssub.s32 %s7, 1
    $region12: #{maxpool2d_3x3.1} parent=5 // pred_fallthru
      _
    %p90 = scmp.lt.s32.totalorder %s7, 2
    // Predicated region
    $region13: #{maxpool2d_3x3.1} parent=5 // pred_check
      %p91 = pneg %p90
    $region14: #{maxpool2d_3x3.1} parent=5 // pred_check_branch
      %93 = sbr.rel (%p91) target = $region16
    $region15: #{maxpool2d_3x3.1} parent=5 // pred_region
      // Predicated region
      $region17: #{maxpool2d_3x3.1} parent=15 // pred_check
        %p94 = pneg %p41
      $region18: #{maxpool2d_3x3.1} parent=15 // pred_check_branch
        %96 = sbr.rel (%p94) target = $region20
      $region19: #{maxpool2d_3x3.1} parent=15 // pred_region
        %s97 = smul.u32 16, %s15
        %p98 = scmp.lt.s32.totalorder %s14, 1
        %s99 = scalar_select %p98, %s14, 1
        %p100 = scmp.lt.s32.totalorder %s97, 15
        %s101 = scalar_select %p100, %s97, 15
        %s102 = smul.addr %s101, 2
        %s103 = smul.addr %s99, 32
        %s104 = sadd.s32 %s102, %s103
        %s105 = smul.addr %s104, 8
        %s106 = scalar_lea.vmem %s0, %s105
        %s107 = smul.u32 16, %s15
      $region20: #{maxpool2d_3x3.1} parent=15 // pred_fallthru
        _
    $region16: #{maxpool2d_3x3.1} parent=5 // pred_fallthru
      _
    %p108 = scmp.le.s32.totalorder 1, %s7
    %p109 = scmp.lt.s32.totalorder %s7, 3
    %p110 = pnand %p108, %p109
    %p111 = pneg %p110
    // Predicated region
    $region21: #{maxpool2d_3x3.1} parent=5 // pred_check
      _
    $region22: #{maxpool2d_3x3.1} parent=5 // pred_check_branch
      %113 = sbr.rel (%p110) target = $region24
    $region23: #{maxpool2d_3x3.1} parent=5 // pred_region
      %s114 = ssub.s32 %s7, 1
      %s115 = smul.u32 16, %s17
      %p116 = scmp.lt.s32.totalorder %s16, 1
      %s117 = scalar_select %p116, %s16, 1
      %p118 = scmp.lt.s32.totalorder %s115, 15
      %s119 = scalar_select %p118, %s115, 15
      %s120 = smul.addr %s119, 2
      %s121 = smul.addr %s117, 32
      %s122 = sadd.s32 %s120, %s121
      %s123 = smul.addr %s122, 8
      %s124 = scalar_lea.vmem %s0, %s123
      %p125 = pneg %p47
      %p126 = pneg %p44
      %p127 = pneg %p75
      %p128 = pneg %p72
      %s129 = smul.u32 5, %s17
      %p130 = scmp.lt.s32.totalorder %s16, 1
      %s131 = scalar_select %p130, %s16, 1
      %p132 = scmp.lt.s32.totalorder %s129, 4
      %s133 = scalar_select %p132, %s129, 4
      %s134 = smul.addr %s131, 5
      %s135 = sadd.s32 %s133, %s134
      %s136 = smul.addr %s135, 8
      %s137 = scalar_lea.vmem %s1, %s136
      %s138 = smul.u32 16, %s17
      %p139 = scmp.lt.s32.totalorder %s16, 1
      %s140 = scalar_select %p139, %s16, 1
      %p141 = scmp.lt.s32.totalorder %s138, 15
      %s142 = scalar_select %p141, %s138, 15
      %s143 = smul.addr %s142, 2
      %s144 = smul.addr %s140, 32
      %s145 = sadd.s32 %s143, %s144
      %s146 = smul.addr %s145, 8
      %s147 = scalar_lea.vmem %s0, %s146
      %s148 = smul.u32 16, %s17
      %s149 = smul.u32 5, %s17
      %p150 = scmp.lt.s32.totalorder %s16, 1
      %s151 = scalar_select %p150, %s16, 1
      %p152 = scmp.lt.s32.totalorder %s149, 4
      %s153 = scalar_select %p152, %s149, 4
      %s154 = smul.addr %s151, 5
      %s155 = sadd.s32 %s153, %s154
      %s156 = smul.addr %s155, 8
      %s157 = scalar_lea.vmem %s1, %s156
      %s158 = smul.u32 5, %s17
      %v159 = vld [vmem:[%s147] sm:$0xff]
      %v160 = vld [vmem:[%s147 + $0x8] sm:$0xff]
      %v161 = vld [vmem:[%s147 + $0x10] sm:$0xff]
      %v162 = vld [vmem:[%s147 + $0x18] sm:$0xff]
      %v163 = vld [vmem:[%s147 + $0x20] sm:$0xff]
      %v164 = vld [vmem:[%s147 + $0x28] sm:$0xff]
      %v165 = vld [vmem:[%s147 + $0x30] sm:$0xff]
      %v166 = vld [vmem:[%s147 + $0x38] sm:$0xff]
      %v167 = vld [vmem:[%s147 + $0x40] sm:$0xff]
      %v168 = vld [vmem:[%s147 + $0x48] sm:$0xff]
      %v169 = vld [vmem:[%s147 + $0x50] sm:$0xff]
      %v170 = vld [vmem:[%s147 + $0x58] sm:$0xff]
      %v171 = vld [vmem:[%s147 + $0x60] sm:$0xff]
      %v172 = vld [vmem:[%s147 + $0x68] sm:$0xff]
      %v173 = vld [vmem:[%s147 + $0x70] sm:$0xff]
      %v174 = vld [vmem:[%s147 + $0x78] sm:$0xff]
      %v175 = vld [vmem:[%s147 + $0x80] sm:$0xff]
      %v176 = vld [vmem:[%s147 + $0x88] sm:$0xff]
      %v177 = vld [vmem:[%s147 + $0x90] sm:$0xff]
      %v178 = vld [vmem:[%s147 + $0x98] sm:$0xff]
      %v179 = vld [vmem:[%s147 + $0xa0] sm:$0xff]
      %v180 = vld [vmem:[%s147 + $0xa8] sm:$0xff]
      %v181 = vld [vmem:[%s147 + $0xb0] sm:$0xff]
      %v182 = vld [vmem:[%s147 + $0xb8] sm:$0xff]
      %v183 = vld [vmem:[%s147 + $0xc0] sm:$0xff]
      %v184 = vld [vmem:[%s147 + $0xc8] sm:$0xff]
      %v185 = vld [vmem:[%s147 + $0xd0] sm:$0xff]
      %v186 = vld [vmem:[%s147 + $0xd8] sm:$0xff]
      %v187 = vld [vmem:[%s147 + $0xe0] sm:$0xff]
      %v188 = vld [vmem:[%s147 + $0xe8] sm:$0xff]
      %vm189 = vcmask 31744
      %v190 = vsel %vm189, %v159, -inf
      %v191 = vsel %vm189, %v161, -inf
      %v192 = vmax.f32 %v190, %v191
      %v193 = vsel %vm189, %v163, -inf
      %v194 = vmax.f32 %v192, %v193
      %v195 = vsel %vm189, %v160, -inf
      %v196 = vsel %vm189, %v162, -inf
      %v197 = vmax.f32 %v195, %v196
      %v198 = vsel %vm189, %v164, -inf
      %v199 = vmax.f32 %v197, %v198
      %v200 = vsel %vm189, %v165, -inf
      %v201 = vsel %vm189, %v167, -inf
      %v202 = vmax.f32 %v200, %v201
      %v203 = vsel %vm189, %v169, -inf
      %v204 = vmax.f32 %v202, %v203
      %v205 = vsel %vm189, %v166, -inf
      %v206 = vsel %vm189, %v168, -inf
      %v207 = vmax.f32 %v205, %v206
      %v208 = vsel %vm189, %v170, -inf
      %v209 = vmax.f32 %v207, %v208
      %v210 = vsel %vm189, %v171, -inf
      %v211 = vsel %vm189, %v173, -inf
      %v212 = vmax.f32 %v210, %v211
      %v213 = vsel %vm189, %v175, -inf
      %v214 = vmax.f32 %v212, %v213
      %v215 = vsel %vm189, %v172, -inf
      %v216 = vsel %vm189, %v174, -inf
      %v217 = vmax.f32 %v215, %v216
      %v218 = vsel %vm189, %v176, -inf
      %v219 = vmax.f32 %v217, %v218
      %v220 = vsel %vm189, %v177, -inf
      %v221 = vsel %vm189, %v179, -inf
      %v222 = vmax.f32 %v220, %v221
      %v223 = vsel %vm189, %v181, -inf
      %v224 = vmax.f32 %v222, %v223
      %v225 = vsel %vm189, %v178, -inf
      %v226 = vsel %vm189, %v180, -inf
      %v227 = vmax.f32 %v225, %v226
      %v228 = vsel %vm189, %v182, -inf
      %v229 = vmax.f32 %v227, %v228
      %v230 = vsel %vm189, %v183, -inf
      %v231 = vsel %vm189, %v185, -inf
      %v232 = vmax.f32 %v230, %v231
      %v233 = vsel %vm189, %v187, -inf
      %v234 = vmax.f32 %v232, %v233
      %v235 = vsel %vm189, %v184, -inf
      %v236 = vsel %vm189, %v186, -inf
      %v237 = vmax.f32 %v235, %v236
      %v238 = vsel %vm189, %v188, -inf
      %v239 = vmax.f32 %v237, %v238
      %vm240 = vcmask 26624
      %v241 = vsel %vm240, %v194, -inf
      %v242 = vrot.slane %v241, 4
      %v243 = vmax.f32 %v241, %v242
      %v244 = vrot.slane %v243, 2
      %v245 = vmax.f32 %v243, %v244
      %v246 = vrot.slane %v245, 1
      %v247 = vmax.f32 %v245, %v246
      %v248 = vsel %vm240, %v204, -inf
      %v249 = vrot.slane %v248, 4
      %v250 = vmax.f32 %v248, %v249
      %v251 = vrot.slane %v250, 2
      %v252 = vmax.f32 %v250, %v251
      %v253 = vrot.slane %v252, 1
      %v254 = vmax.f32 %v252, %v253
      %v255 = vsel %vm240, %v214, -inf
      %v256 = vrot.slane %v255, 4
      %v257 = vmax.f32 %v255, %v256
      %v258 = vrot.slane %v257, 2
      %v259 = vmax.f32 %v257, %v258
      %v260 = vrot.slane %v259, 1
      %v261 = vmax.f32 %v259, %v260
      %v262 = vsel %vm240, %v224, -inf
      %v263 = vrot.slane %v262, 4
      %v264 = vmax.f32 %v262, %v263
      %v265 = vrot.slane %v264, 2
      %v266 = vmax.f32 %v264, %v265
      %v267 = vrot.slane %v266, 1
      %v268 = vmax.f32 %v266, %v267
      %v269 = vsel %vm240, %v234, -inf
      %v270 = vrot.slane %v269, 4
      %v271 = vmax.f32 %v269, %v270
      %v272 = vrot.slane %v271, 2
      %v273 = vmax.f32 %v271, %v272
      %v274 = vrot.slane %v273, 1
      %v275 = vmax.f32 %v273, %v274
      %vm276 = vcmask 29699
      %v277 = vsel %vm276, %v194, -inf
      %v278 = vrot.slane %v277, 4
      %v279 = vmax.f32 %v277, %v278
      %v280 = vrot.slane %v279, 2
      %v281 = vmax.f32 %v279, %v280
      %v282 = vrot.slane %v281, 1
      %v283 = vmax.f32 %v281, %v282
      %v284 = vsel %vm276, %v204, -inf
      %v285 = vrot.slane %v284, 4
      %v286 = vmax.f32 %v284, %v285
      %v287 = vrot.slane %v286, 2
      %v288 = vmax.f32 %v286, %v287
      %v289 = vrot.slane %v288, 1
      %v290 = vmax.f32 %v288, %v289
      %v291 = vsel %vm276, %v214, -inf
      %v292 = vrot.slane %v291, 4
      %v293 = vmax.f32 %v291, %v292
      %v294 = vrot.slane %v293, 2
      %v295 = vmax.f32 %v293, %v294
      %v296 = vrot.slane %v295, 1
      %v297 = vmax.f32 %v295, %v296
      %v298 = vsel %vm276, %v224, -inf
      %v299 = vrot.slane %v298, 4
      %v300 = vmax.f32 %v298, %v299
      %v301 = vrot.slane %v300, 2
      %v302 = vmax.f32 %v300, %v301
      %v303 = vrot.slane %v302, 1
      %v304 = vmax.f32 %v302, %v303
      %v305 = vsel %vm276, %v234, -inf
      %v306 = vrot.slane %v305, 4
      %v307 = vmax.f32 %v305, %v306
      %v308 = vrot.slane %v307, 2
      %v309 = vmax.f32 %v307, %v308
      %v310 = vrot.slane %v309, 1
      %v311 = vmax.f32 %v309, %v310
      %vm312 = vcmask 31750
      %v313 = vsel %vm312, %v194, -inf
      %vm314 = vcmask 24576
      %v315 = vsel %vm314, %v199, -inf
      %v316 = vmax.f32 %v313, %v315
      %v317 = vrot.slane %v316, 4
      %v318 = vmax.f32 %v316, %v317
      %v319 = vrot.slane %v318, 2
      %v320 = vmax.f32 %v318, %v319
      %v321 = vrot.slane %v320, 1
      %v322 = vmax.f32 %v320, %v321
      %v323 = vsel %vm312, %v204, -inf
      %v324 = vsel %vm314, %v209, -inf
      %v325 = vmax.f32 %v323, %v324
      %v326 = vrot.slane %v325, 4
      %v327 = vmax.f32 %v325, %v326
      %v328 = vrot.slane %v327, 2
      %v329 = vmax.f32 %v327, %v328
      %v330 = vrot.slane %v329, 1
      %v331 = vmax.f32 %v329, %v330
      %v332 = vsel %vm312, %v214, -inf
      %v333 = vsel %vm314, %v219, -inf
      %v334 = vmax.f32 %v332, %v333
      %v335 = vrot.slane %v334, 4
      %v336 = vmax.f32 %v334, %v335
      %v337 = vrot.slane %v336, 2
      %v338 = vmax.f32 %v336, %v337
      %v339 = vrot.slane %v338, 1
      %v340 = vmax.f32 %v338, %v339
      %v341 = vsel %vm312, %v224, -inf
      %v342 = vsel %vm314, %v229, -inf
      %v343 = vmax.f32 %v341, %v342
      %v344 = vrot.slane %v343, 4
      %v345 = vmax.f32 %v343, %v344
      %v346 = vrot.slane %v345, 2
      %v347 = vmax.f32 %v345, %v346
      %v348 = vrot.slane %v347, 1
      %v349 = vmax.f32 %v347, %v348
      %v350 = vsel %vm312, %v234, -inf
      %v351 = vsel %vm314, %v239, -inf
      %v352 = vmax.f32 %v350, %v351
      %v353 = vrot.slane %v352, 4
      %v354 = vmax.f32 %v352, %v353
      %v355 = vrot.slane %v354, 2
      %v356 = vmax.f32 %v354, %v355
      %v357 = vrot.slane %v356, 1
      %v358 = vmax.f32 %v356, %v357
      %vm359 = vcmask 27649
      %v360 = vsel %vm359, %v199, -inf
      %v361 = vrot.slane %v360, 4
      %v362 = vmax.f32 %v360, %v361
      %v363 = vrot.slane %v362, 2
      %v364 = vmax.f32 %v362, %v363
      %v365 = vrot.slane %v364, 1
      %v366 = vmax.f32 %v364, %v365
      %v367 = vsel %vm359, %v209, -inf
      %v368 = vrot.slane %v367, 4
      %v369 = vmax.f32 %v367, %v368
      %v370 = vrot.slane %v369, 2
      %v371 = vmax.f32 %v369, %v370
      %v372 = vrot.slane %v371, 1
      %v373 = vmax.f32 %v371, %v372
      %v374 = vsel %vm359, %v219, -inf
      %v375 = vrot.slane %v374, 4
      %v376 = vmax.f32 %v374, %v375
      %v377 = vrot.slane %v376, 2
      %v378 = vmax.f32 %v376, %v377
      %v379 = vrot.slane %v378, 1
      %v380 = vmax.f32 %v378, %v379
      %v381 = vsel %vm359, %v229, -inf
      %v382 = vrot.slane %v381, 4
      %v383 = vmax.f32 %v381, %v382
      %v384 = vrot.slane %v383, 2
      %v385 = vmax.f32 %v383, %v384
      %v386 = vrot.slane %v385, 1
      %v387 = vmax.f32 %v385, %v386
      %v388 = vsel %vm359, %v239, -inf
      %v389 = vrot.slane %v388, 4
      %v390 = vmax.f32 %v388, %v389
      %v391 = vrot.slane %v390, 2
      %v392 = vmax.f32 %v390, %v391
      %v393 = vrot.slane %v392, 1
      %v394 = vmax.f32 %v392, %v393
      %vm395 = vcmask 30724
      %v396 = vsel %vm395, %v199, -inf
      %v397 = vrot.slane %v396, 4
      %v398 = vmax.f32 %v396, %v397
      %v399 = vrot.slane %v398, 2
      %v400 = vmax.f32 %v398, %v399
      %v401 = vrot.slane %v400, 1
      %v402 = vmax.f32 %v400, %v401
      %v403 = vsel %vm395, %v209, -inf
      %v404 = vrot.slane %v403, 4
      %v405 = vmax.f32 %v403, %v404
      %v406 = vrot.slane %v405, 2
      %v407 = vmax.f32 %v405, %v406
      %v408 = vrot.slane %v407, 1
      %v409 = vmax.f32 %v407, %v408
      %v410 = vsel %vm395, %v219, -inf
      %v411 = vrot.slane %v410, 4
      %v412 = vmax.f32 %v410, %v411
      %v413 = vrot.slane %v412, 2
      %v414 = vmax.f32 %v412, %v413
      %v415 = vrot.slane %v414, 1
      %v416 = vmax.f32 %v414, %v415
      %v417 = vsel %vm395, %v229, -inf
      %v418 = vrot.slane %v417, 4
      %v419 = vmax.f32 %v417, %v418
      %v420 = vrot.slane %v419, 2
      %v421 = vmax.f32 %v419, %v420
      %v422 = vrot.slane %v421, 1
      %v423 = vmax.f32 %v421, %v422
      %v424 = vsel %vm395, %v239, -inf
      %v425 = vrot.slane %v424, 4
      %v426 = vmax.f32 %v424, %v425
      %v427 = vrot.slane %v426, 2
      %v428 = vmax.f32 %v426, %v427
      %v429 = vrot.slane %v428, 1
      %v430 = vmax.f32 %v428, %v429
      %vm431 = vcmask 1040384
      %v432 = vsel %vm431, %v247, %v283
      %v433 = vsel %vm431, %v254, %v290
      %v434 = vsel %vm431, %v261, %v297
      %v435 = vsel %vm431, %v268, %v304
      %v436 = vsel %vm431, %v275, %v311
      %vm437 = vcmask 1041408
      %v438 = vsel %vm437, %v432, %v322
      %v439 = vsel %vm437, %v433, %v331
      %v440 = vsel %vm437, %v434, %v340
      %v441 = vsel %vm437, %v435, %v349
      %v442 = vsel %vm437, %v436, %v358
      %vm443 = vcmask 1042432
      %v444 = vsel %vm443, %v438, %v366
      %v445 = vsel %vm443, %v439, %v373
      %v446 = vsel %vm443, %v440, %v380
      %v447 = vsel %vm443, %v441, %v387
      %v448 = vsel %vm443, %v442, %v394
      %vm449 = vcmask 1043456
      %v450 = vsel %vm449, %v444, %v402
      %v451 = vsel %vm449, %v445, %v409
      %v452 = vsel %vm449, %v446, %v416
      %v453 = vsel %vm449, %v447, %v423
      %v454 = vsel %vm449, %v448, %v430
      %vm455 = vcmask 28672
      %456 = vst.msk [vmem:[%s157] sm:$0x1f] %vm455, %v450
      %457 = vst.msk [vmem:[%s157 + $0x8] sm:$0x1f] %vm455, %v451
      %458 = vst.msk [vmem:[%s157 + $0x10] sm:$0x1f] %vm455, %v452
      %459 = vst.msk [vmem:[%s157 + $0x18] sm:$0x1f] %vm455, %v453
      %460 = vst.msk [vmem:[%s157 + $0x20] sm:$0x1f] %vm455, %v454
      %s461 = smul.u32 5, %s17
      %p462 = scmp.lt.s32.totalorder %s16, 1
      %s463 = scalar_select %p462, %s16, 1
      %p464 = scmp.lt.s32.totalorder %s461, 4
      %s465 = scalar_select %p464, %s461, 4
      %s466 = smul.addr %s463, 5
      %s467 = sadd.s32 %s465, %s466
      %s468 = smul.addr %s467, 8
      %s469 = scalar_lea.vmem %s1, %s468
      // Predicated region
      $region25: #{maxpool2d_3x3.1} parent=23 // pred_check
        %p470 = pneg %p72
      $region26: #{maxpool2d_3x3.1} parent=23 // pred_check_branch
        %472 = sbr.rel (%p470) target = $region28
      $region27: #{maxpool2d_3x3.1} parent=23 // pred_region
        %s473 = smul.u32 5, %s17
      $region28: #{maxpool2d_3x3.1} parent=23 // pred_fallthru
        _
    $region24: #{maxpool2d_3x3.1} parent=5 // pred_fallthru
      _
    %p474 = scmp.le.s32.totalorder 2, %s7
    // Predicated region
    $region29: #{maxpool2d_3x3.1} parent=5 // pred_check
      %p475 = pneg %p474
    $region30: #{maxpool2d_3x3.1} parent=5 // pred_check_branch
      %477 = sbr.rel (%p475) target = $region32
    $region31: #{maxpool2d_3x3.1} parent=5 // pred_region
      %s478 = ssub.s32 %s7, 2
      // Predicated region
      $region33: #{maxpool2d_3x3.1} parent=31 // pred_check
        %p479 = pneg %p78
      $region34: #{maxpool2d_3x3.1} parent=31 // pred_check_branch
        %481 = sbr.rel (%p479) target = $region36
      $region35: #{maxpool2d_3x3.1} parent=31 // pred_region
        %s482 = smul.u32 5, %s19
        %p483 = scmp.lt.s32.totalorder %s18, 1
        %s484 = scalar_select %p483, %s18, 1
        %p485 = scmp.lt.s32.totalorder %s482, 4
        %s486 = scalar_select %p485, %s482, 4
        %s487 = smul.addr %s484, 5
        %s488 = sadd.s32 %s486, %s487
        %s489 = smul.addr %s488, 8
        %s490 = scalar_lea.vmem %s1, %s489
      $region36: #{maxpool2d_3x3.1} parent=31 // pred_fallthru
        _
    $region32: #{maxpool2d_3x3.1} parent=5 // pred_fallthru
      _
  $region6: #{maxpool2d_3x3.1} parent=0 // loop_footer
    %s11 = sadd.s32 1, %s7
  $region7: #{maxpool2d_3x3.1} parent=0 // loop_footer_branch
    %6 = sbr.rel target = $region3
  $region8: #{maxpool2d_3x3.1} parent=0 // loop_exit
    _

</llo_original>
